<compile_context>
chip_gen: v7x
topology: tpu7x:2x2x1
jax: 0.10.0
libtpu: 0.0.40
codegen_flags: <defaults>
</compile_context>

<pallas_src>
import jax
import jax.numpy as jnp
from jax.experimental import pallas as pl
from jax.experimental.pallas import tpu as pltpu

EPS = 1e-5
H_PAD = 256       # padded hidden width (160 -> 256)
OUT_LANES = 128   # lane-dense output row width
P_ROWS = 16       # packed small-parameter slab rows (11 used, padded to 16)

# row layout of the packed small-parameter slab
_R_B1, _R_G1, _R_BE1 = 0, 1, 2
_R_B2, _R_G2, _R_BE2 = 3, 4, 5
_R_B3, _R_G3, _R_BE3 = 6, 7, 8
_R_WO, _R_BO = 9, 10


def _bn_scale_shift(h, gamma, beta, inv_b):
    """Training-mode BatchNorm1d (biased variance, eps=1e-5) as h*scale+shift."""
    s = jnp.sum(h, axis=0, keepdims=True)
    ss = jnp.sum(h * h, axis=0, keepdims=True)
    mu = s * inv_b
    var = ss * inv_b - mu * mu            # biased variance (one-pass)
    scale = gamma * jax.lax.rsqrt(var + EPS)
    shift = beta - mu * scale
    return scale, shift


def mlp_kernel(x_ref, w1_ref, w23_ref, p_ref, out_ref):
    B = x_ref.shape[0]                    # static batch size
    inv_b = 1.0 / B

    p = p_ref[...]                        # (16, 256) f32 packed small params
    b1, g1, be1 = p[_R_B1:_R_B1 + 1], p[_R_G1:_R_G1 + 1], p[_R_BE1:_R_BE1 + 1]
    b2, g2, be2 = p[_R_B2:_R_B2 + 1], p[_R_G2:_R_G2 + 1], p[_R_BE2:_R_BE2 + 1]
    b3, g3, be3 = p[_R_B3:_R_B3 + 1], p[_R_G3:_R_G3 + 1], p[_R_BE3:_R_BE3 + 1]
    wo_row = p[_R_WO:_R_WO + 1]           # (1, 256): transposed layer_out weight
    bo_row = p[_R_BO:_R_BO + 1]           # (1, 256): bo in lane 0, zeros elsewhere

    # layer_1 (bf16 MXU, f32 accumulate) -> relu -> batchnorm1
    x = x_ref[...].astype(jnp.bfloat16)   # in-kernel cast (VPU, hidden under MXU)
    h = jnp.dot(x, w1_ref[...], preferred_element_type=jnp.float32) + b1
    h = jnp.maximum(h, 0.0)
    s1, t1 = _bn_scale_shift(h, g1, be1, inv_b)
    h = h * s1 + t1

    # layer_2 -> relu -> batchnorm2
    h = jnp.dot(h.astype(jnp.bfloat16), w23_ref[0],
                preferred_element_type=jnp.float32) + b2
    h = jnp.maximum(h, 0.0)
    s2, t2 = _bn_scale_shift(h, g2, be2, inv_b)
    h = h * s2 + t2

    # layer_3 -> relu; batchnorm3 is folded into the output layer below
    h = jnp.dot(h.astype(jnp.bfloat16), w23_ref[1],
                preferred_element_type=jnp.float32) + b3
    h = jnp.maximum(h, 0.0)
    s3, t3 = _bn_scale_shift(h, g3, be3, inv_b)

    # dropout(p=0.0) is the identity.
    # layer_out fused with BN3:
    #   z = bn3(h) @ wo + bo = h @ (s3*wo) + (sum(t3*wo) + bo)
    w_eff = s3 * wo_row                                       # (1, 256)
    c = jnp.sum(t3 * wo_row + bo_row, axis=-1, keepdims=True)  # (1, 1): + bo
    z = jnp.sum(h * w_eff, axis=-1, keepdims=True) + c         # (B, 1)
    y = jax.nn.sigmoid(z)                                      # (B, 1) f32

    # Batch-packed lane-dense store: out[0, b] = y[b]; unused lanes get 0.
    row = jax.lax.broadcasted_iota(jnp.int32, (B, OUT_LANES), 0)
    lane = jax.lax.broadcasted_iota(jnp.int32, (B, OUT_LANES), 1)
    scattered = jnp.where(row == lane, jnp.broadcast_to(y, (B, OUT_LANES)), 0.0)
    out_ref[...] = jnp.sum(scattered, axis=0, keepdims=True)   # (1, 128)


def make_params(key, n_in, n_hidden=160, n_out=1):
    """Deterministic PyTorch-style (uniform +-1/sqrt(fan_in)) init, logical f32."""
    def linear(k, fan_in, fan_out):
        kw, kb = jax.random.split(k)
        bound = 1.0 / jnp.sqrt(jnp.float32(fan_in))
        w = jax.random.uniform(kw, (fan_in, fan_out), jnp.float32, -bound, bound)
        b = jax.random.uniform(kb, (1, fan_out), jnp.float32, -bound, bound)
        return w, b

    k1, k2, k3, k4 = jax.random.split(key, 4)
    w1, b1 = linear(k1, n_in, n_hidden)
    w2, b2 = linear(k2, n_hidden, n_hidden)
    w3, b3 = linear(k3, n_hidden, n_hidden)
    wo, bo = linear(k4, n_hidden, n_out)
    ones = jnp.ones((1, n_hidden), jnp.float32)
    zeros = jnp.zeros((1, n_hidden), jnp.float32)
    return dict(w1=w1, b1=b1, g1=ones, be1=zeros,
                w2=w2, b2=b2, g2=ones, be2=zeros,
                w3=w3, b3=b3, g3=ones, be3=zeros,
                wo=wo, bo=bo)


def pack_params(p, n_hidden, h_pad=H_PAD):
    """Pad hidden width to h_pad, cast matmul weights to bf16, coalesce the
    small vector params into a single (16, h_pad) f32 slab."""
    pad_c = h_pad - n_hidden

    def pad_cols(a):
        return jnp.pad(a, ((0, 0), (0, pad_c)))

    def pad_rows(a):
        return jnp.pad(a, ((0, pad_c), (0, 0)))

    w1 = pad_cols(p["w1"]).astype(jnp.bfloat16)              # (n_in, h_pad)
    w2 = pad_cols(pad_rows(p["w2"])).astype(jnp.bfloat16)    # (h_pad, h_pad)
    w3 = pad_cols(pad_rows(p["w3"])).astype(jnp.bfloat16)
    w23 = jnp.stack([w2, w3], axis=0)                         # (2, h_pad, h_pad)

    def row(a):                                               # (1,n_hidden)->(h_pad,)
        return pad_cols(a)[0]

    wo_row = pad_cols(p["wo"].T)[0]                           # (h_pad,)
    bo_row = jnp.zeros((h_pad,), jnp.float32).at[0].set(p["bo"][0, 0])
    zero_row = jnp.zeros((h_pad,), jnp.float32)
    small = jnp.stack(
        [row(p["b1"]), row(p["g1"]), row(p["be1"]),
         row(p["b2"]), row(p["g2"]), row(p["be2"]),
         row(p["b3"]), row(p["g3"]), row(p["be3"]),
         wo_row, bo_row] + [zero_row] * (P_ROWS - 11), axis=0)  # (16, h_pad)

    # Padded-column safety (review concern): everything in lanes >= n_hidden
    # must be exactly zero, otherwise rsqrt(eps) on var==0 columns leaks.
    assert bool(jnp.all(small[:, n_hidden:] == 0.0))
    assert bool(jnp.all(w1[:, n_hidden:] == 0))
    assert bool(jnp.all(w23[:, n_hidden:, :] == 0))
    assert bool(jnp.all(w23[:, :, n_hidden:] == 0))

    return dict(w1=w1, w23=w23, p=small)


def mlp_forward(x, packed, n_out=1):
    assert n_out == 1, "kernel uses a fused VPU dot for the n_out == 1 output layer"
    B = x.shape[0]
    # TODO(synk): B > 128 needs a batch-tiled grid + cross-tile BN statistics.
    assert B <= OUT_LANES, "single-shot kernel packs the batch along lanes"
    args = (x.astype(jnp.float32), packed["w1"], packed["w23"], packed["p"])
    out = pl.pallas_call(
        mlp_kernel,
        out_shape=jax.ShapeDtypeStruct((1, OUT_LANES), jnp.float32),
        in_specs=[pl.BlockSpec(memory_space=pltpu.MemorySpace.VMEM)
                  for _ in args],
        out_specs=pl.BlockSpec(memory_space=pltpu.MemorySpace.VMEM),
    )(*args)
    return out[0, :B].reshape(B, n_out)


def mlp_reference(x, params):
    """Pure-JAX f32 reference (training-mode BN, biased variance, eps=1e-5)."""
    def bn(h, g, b):
        mu = jnp.mean(h, axis=0, keepdims=True)
        var = jnp.mean((h - mu) ** 2, axis=0, keepdims=True)
        return (h - mu) * jax.lax.rsqrt(var + EPS) * g + b

    h = jnp.maximum(x @ params["w1"] + params["b1"], 0.0)
    h = bn(h, params["g1"], params["be1"])
    h = jnp.maximum(h @ params["w2"] + params["b2"], 0.0)
    h = bn(h, params["g2"], params["be2"])
    h = jnp.maximum(h @ params["w3"] + params["b3"], 0.0)
    h = bn(h, params["g3"], params["be3"])
    return jax.nn.sigmoid(h @ params["wo"] + params["bo"])


if __name__ == "__main__":
    B, N_IN, N_HIDDEN, N_OUT = 8, 32, 160, 1
    key = jax.random.PRNGKey(0)
    kx, kp = jax.random.split(key)
    x = jax.random.normal(kx, (B, N_IN), jnp.float32)

    params = make_params(kp, N_IN, N_HIDDEN, N_OUT)
    packed = pack_params(params, N_HIDDEN)

    out = mlp_forward(x, packed, N_OUT)
    jax.block_until_ready(out)

    ref = mlp_reference(x, params)
    assert out.shape == (B, N_OUT)
    # bf16 MXU operands vs f32 reference -> loose tolerance on the sigmoid output.
    assert jnp.allclose(out, ref, atol=3e-2, rtol=3e-2), (
        f"max abs err {jnp.max(jnp.abs(out - ref))}")
    print("KERNEL_OK")
</pallas_src>

<mosaic_0001>
module attributes {stable_mosaic.version = 11 : i64} {
  func.func @mlp_kernel(%arg0: memref<8x32xf32, #tpu.memory_space<vmem>>, %arg1: memref<32x256xbf16, #tpu.memory_space<vmem>>, %arg2: memref<2x256x256xbf16, #tpu.memory_space<vmem>>, %arg3: memref<16x256xf32, #tpu.memory_space<vmem>>, %arg4: memref<1x128xf32, #tpu.memory_space<vmem>>) attributes {dimension_semantics = [], scalar_prefetch = 0 : i64, scratch_operands = 0 : i64, tpu.core_type = #tpu.core_type<tc>} {
    %c0 = arith.constant 0 : index
    %c0_0 = arith.constant 0 : index
    %0 = vector.load %arg3[%c0, %c0_0] : memref<16x256xf32, #tpu.memory_space<vmem>>, vector<16x256xf32>
    %1 = vector.extract_strided_slice %0 {offsets = [0, 0], sizes = [1, 256], strides = [1, 1]} : vector<16x256xf32> to vector<1x256xf32>
    %2 = vector.extract_strided_slice %0 {offsets = [1, 0], sizes = [1, 256], strides = [1, 1]} : vector<16x256xf32> to vector<1x256xf32>
    %3 = vector.extract_strided_slice %0 {offsets = [2, 0], sizes = [1, 256], strides = [1, 1]} : vector<16x256xf32> to vector<1x256xf32>
    %4 = vector.extract_strided_slice %0 {offsets = [3, 0], sizes = [1, 256], strides = [1, 1]} : vector<16x256xf32> to vector<1x256xf32>
    %5 = vector.extract_strided_slice %0 {offsets = [4, 0], sizes = [1, 256], strides = [1, 1]} : vector<16x256xf32> to vector<1x256xf32>
    %6 = vector.extract_strided_slice %0 {offsets = [5, 0], sizes = [1, 256], strides = [1, 1]} : vector<16x256xf32> to vector<1x256xf32>
    %7 = vector.extract_strided_slice %0 {offsets = [6, 0], sizes = [1, 256], strides = [1, 1]} : vector<16x256xf32> to vector<1x256xf32>
    %8 = vector.extract_strided_slice %0 {offsets = [7, 0], sizes = [1, 256], strides = [1, 1]} : vector<16x256xf32> to vector<1x256xf32>
    %9 = vector.extract_strided_slice %0 {offsets = [8, 0], sizes = [1, 256], strides = [1, 1]} : vector<16x256xf32> to vector<1x256xf32>
    %10 = vector.extract_strided_slice %0 {offsets = [9, 0], sizes = [1, 256], strides = [1, 1]} : vector<16x256xf32> to vector<1x256xf32>
    %11 = vector.extract_strided_slice %0 {offsets = [10, 0], sizes = [1, 256], strides = [1, 1]} : vector<16x256xf32> to vector<1x256xf32>
    %c0_1 = arith.constant 0 : index
    %c0_2 = arith.constant 0 : index
    %12 = vector.load %arg0[%c0_1, %c0_2] : memref<8x32xf32, #tpu.memory_space<vmem>>, vector<8x32xf32>
    %13 = arith.truncf %12 : vector<8x32xf32> to vector<8x32xbf16>
    %c0_3 = arith.constant 0 : index
    %c0_4 = arith.constant 0 : index
    %14 = vector.load %arg1[%c0_3, %c0_4] : memref<32x256xbf16, #tpu.memory_space<vmem>>, vector<32x256xbf16>
    %cst = arith.constant dense<0.000000e+00> : vector<8x256xf32>
    %15 = tpu.matmul %13, %14, %cst {dimension_numbers = #tpu.dot_dimension_numbers<[1], [0], [0], [1], [0, 0, 1, 1], [], []>} : vector<8x32xbf16>, vector<32x256xbf16>, vector<8x256xf32> -> vector<8x256xf32>
    %16 = vector.broadcast %1 : vector<1x256xf32> to vector<8x256xf32>
    %17 = arith.addf %15, %16 : vector<8x256xf32>
    %cst_5 = arith.constant 0.000000e+00 : f32
    %18 = vector.broadcast %cst_5 : f32 to vector<8x256xf32>
    %19 = arith.maximumf %17, %18 : vector<8x256xf32>
    %cst_6 = arith.constant dense<0.000000e+00> : vector<256xf32>
    %20 = vector.multi_reduction <add>, %19, %cst_6 [0] : vector<8x256xf32> to vector<256xf32>
    %21 = vector.shape_cast %20 : vector<256xf32> to vector<1x256xf32>
    %22 = arith.mulf %19, %19 : vector<8x256xf32>
    %cst_7 = arith.constant dense<0.000000e+00> : vector<256xf32>
    %23 = vector.multi_reduction <add>, %22, %cst_7 [0] : vector<8x256xf32> to vector<256xf32>
    %24 = vector.shape_cast %23 : vector<256xf32> to vector<1x256xf32>
    %cst_8 = arith.constant 1.250000e-01 : f32
    %25 = vector.broadcast %cst_8 : f32 to vector<1x256xf32>
    %26 = arith.mulf %21, %25 : vector<1x256xf32>
    %cst_9 = arith.constant 1.250000e-01 : f32
    %27 = vector.broadcast %cst_9 : f32 to vector<1x256xf32>
    %28 = arith.mulf %24, %27 : vector<1x256xf32>
    %29 = arith.mulf %26, %26 : vector<1x256xf32>
    %30 = arith.subf %28, %29 : vector<1x256xf32>
    %cst_10 = arith.constant 9.99999974E-6 : f32
    %31 = vector.broadcast %cst_10 : f32 to vector<1x256xf32>
    %32 = arith.addf %30, %31 : vector<1x256xf32>
    %33 = math.rsqrt %32 : vector<1x256xf32>
    %34 = arith.mulf %2, %33 : vector<1x256xf32>
    %35 = arith.mulf %26, %34 : vector<1x256xf32>
    %36 = arith.subf %3, %35 : vector<1x256xf32>
    %37 = vector.broadcast %34 : vector<1x256xf32> to vector<8x256xf32>
    %38 = arith.mulf %19, %37 : vector<8x256xf32>
    %39 = vector.broadcast %36 : vector<1x256xf32> to vector<8x256xf32>
    %40 = arith.addf %38, %39 : vector<8x256xf32>
    %41 = arith.truncf %40 : vector<8x256xf32> to vector<8x256xbf16>
    %c0_11 = arith.constant 0 : index
    %c0_12 = arith.constant 0 : index
    %c0_13 = arith.constant 0 : index
    %42 = vector.load %arg2[%c0_11, %c0_12, %c0_13] : memref<2x256x256xbf16, #tpu.memory_space<vmem>>, vector<1x256x256xbf16>
    %43 = vector.shape_cast %42 : vector<1x256x256xbf16> to vector<256x256xbf16>
    %cst_14 = arith.constant dense<0.000000e+00> : vector<8x256xf32>
    %44 = tpu.matmul %41, %43, %cst_14 {dimension_numbers = #tpu.dot_dimension_numbers<[1], [0], [0], [1], [0, 0, 1, 1], [], []>} : vector<8x256xbf16>, vector<256x256xbf16>, vector<8x256xf32> -> vector<8x256xf32>
    %45 = vector.broadcast %4 : vector<1x256xf32> to vector<8x256xf32>
    %46 = arith.addf %44, %45 : vector<8x256xf32>
    %cst_15 = arith.constant 0.000000e+00 : f32
    %47 = vector.broadcast %cst_15 : f32 to vector<8x256xf32>
    %48 = arith.maximumf %46, %47 : vector<8x256xf32>
    %cst_16 = arith.constant dense<0.000000e+00> : vector<256xf32>
    %49 = vector.multi_reduction <add>, %48, %cst_16 [0] : vector<8x256xf32> to vector<256xf32>
    %50 = vector.shape_cast %49 : vector<256xf32> to vector<1x256xf32>
    %51 = arith.mulf %48, %48 : vector<8x256xf32>
    %cst_17 = arith.constant dense<0.000000e+00> : vector<256xf32>
    %52 = vector.multi_reduction <add>, %51, %cst_17 [0] : vector<8x256xf32> to vector<256xf32>
    %53 = vector.shape_cast %52 : vector<256xf32> to vector<1x256xf32>
    %cst_18 = arith.constant 1.250000e-01 : f32
    %54 = vector.broadcast %cst_18 : f32 to vector<1x256xf32>
    %55 = arith.mulf %50, %54 : vector<1x256xf32>
    %cst_19 = arith.constant 1.250000e-01 : f32
    %56 = vector.broadcast %cst_19 : f32 to vector<1x256xf32>
    %57 = arith.mulf %53, %56 : vector<1x256xf32>
    %58 = arith.mulf %55, %55 : vector<1x256xf32>
    %59 = arith.subf %57, %58 : vector<1x256xf32>
    %cst_20 = arith.constant 9.99999974E-6 : f32
    %60 = vector.broadcast %cst_20 : f32 to vector<1x256xf32>
    %61 = arith.addf %59, %60 : vector<1x256xf32>
    %62 = math.rsqrt %61 : vector<1x256xf32>
    %63 = arith.mulf %5, %62 : vector<1x256xf32>
    %64 = arith.mulf %55, %63 : vector<1x256xf32>
    %65 = arith.subf %6, %64 : vector<1x256xf32>
    %66 = vector.broadcast %63 : vector<1x256xf32> to vector<8x256xf32>
    %67 = arith.mulf %48, %66 : vector<8x256xf32>
    %68 = vector.broadcast %65 : vector<1x256xf32> to vector<8x256xf32>
    %69 = arith.addf %67, %68 : vector<8x256xf32>
    %70 = arith.truncf %69 : vector<8x256xf32> to vector<8x256xbf16>
    %c1 = arith.constant 1 : index
    %c0_21 = arith.constant 0 : index
    %c0_22 = arith.constant 0 : index
    %71 = vector.load %arg2[%c1, %c0_21, %c0_22] : memref<2x256x256xbf16, #tpu.memory_space<vmem>>, vector<1x256x256xbf16>
    %72 = vector.shape_cast %71 : vector<1x256x256xbf16> to vector<256x256xbf16>
    %cst_23 = arith.constant dense<0.000000e+00> : vector<8x256xf32>
    %73 = tpu.matmul %70, %72, %cst_23 {dimension_numbers = #tpu.dot_dimension_numbers<[1], [0], [0], [1], [0, 0, 1, 1], [], []>} : vector<8x256xbf16>, vector<256x256xbf16>, vector<8x256xf32> -> vector<8x256xf32>
    %74 = vector.broadcast %7 : vector<1x256xf32> to vector<8x256xf32>
    %75 = arith.addf %73, %74 : vector<8x256xf32>
    %cst_24 = arith.constant 0.000000e+00 : f32
    %76 = vector.broadcast %cst_24 : f32 to vector<8x256xf32>
    %77 = arith.maximumf %75, %76 : vector<8x256xf32>
    %cst_25 = arith.constant dense<0.000000e+00> : vector<256xf32>
    %78 = vector.multi_reduction <add>, %77, %cst_25 [0] : vector<8x256xf32> to vector<256xf32>
    %79 = vector.shape_cast %78 : vector<256xf32> to vector<1x256xf32>
    %80 = arith.mulf %77, %77 : vector<8x256xf32>
    %cst_26 = arith.constant dense<0.000000e+00> : vector<256xf32>
    %81 = vector.multi_reduction <add>, %80, %cst_26 [0] : vector<8x256xf32> to vector<256xf32>
    %82 = vector.shape_cast %81 : vector<256xf32> to vector<1x256xf32>
    %cst_27 = arith.constant 1.250000e-01 : f32
    %83 = vector.broadcast %cst_27 : f32 to vector<1x256xf32>
    %84 = arith.mulf %79, %83 : vector<1x256xf32>
    %cst_28 = arith.constant 1.250000e-01 : f32
    %85 = vector.broadcast %cst_28 : f32 to vector<1x256xf32>
    %86 = arith.mulf %82, %85 : vector<1x256xf32>
    %87 = arith.mulf %84, %84 : vector<1x256xf32>
    %88 = arith.subf %86, %87 : vector<1x256xf32>
    %cst_29 = arith.constant 9.99999974E-6 : f32
    %89 = vector.broadcast %cst_29 : f32 to vector<1x256xf32>
    %90 = arith.addf %88, %89 : vector<1x256xf32>
    %91 = math.rsqrt %90 : vector<1x256xf32>
    %92 = arith.mulf %8, %91 : vector<1x256xf32>
    %93 = arith.mulf %84, %92 : vector<1x256xf32>
    %94 = arith.subf %9, %93 : vector<1x256xf32>
    %95 = arith.mulf %92, %10 : vector<1x256xf32>
    %96 = arith.mulf %94, %10 : vector<1x256xf32>
    %97 = arith.addf %96, %11 : vector<1x256xf32>
    %cst_30 = arith.constant dense<0.000000e+00> : vector<1xf32>
    %98 = vector.multi_reduction <add>, %97, %cst_30 [1] : vector<1x256xf32> to vector<1xf32>
    %99 = vector.shape_cast %98 : vector<1xf32> to vector<1x1xf32>
    %100 = vector.broadcast %95 : vector<1x256xf32> to vector<8x256xf32>
    %101 = arith.mulf %77, %100 : vector<8x256xf32>
    %cst_31 = arith.constant dense<0.000000e+00> : vector<8xf32>
    %102 = vector.multi_reduction <add>, %101, %cst_31 [1] : vector<8x256xf32> to vector<8xf32>
    %103 = vector.shape_cast %102 : vector<8xf32> to vector<8x1xf32>
    %104 = vector.broadcast %99 : vector<1x1xf32> to vector<8x1xf32>
    %105 = arith.addf %103, %104 : vector<8x1xf32>
    %106 = arith.negf %105 : vector<8x1xf32>
    %107 = math.exp %106 : vector<8x1xf32>
    %cst_32 = arith.constant 1.000000e+00 : f32
    %108 = vector.broadcast %cst_32 : f32 to vector<8x1xf32>
    %109 = arith.addf %108, %107 : vector<8x1xf32>
    %110 = arith.divf %108, %109 : vector<8x1xf32>
    %111 = tpu.iota {dimensions = array<i32: 0>} : vector<8x128xi32>
    %112 = tpu.iota {dimensions = array<i32: 1>} : vector<8x128xi32>
    %113 = arith.cmpi eq, %111, %112 : vector<8x128xi32>
    %114 = vector.shape_cast %110 : vector<8x1xf32> to vector<8x1xf32>
    %115 = vector.broadcast %114 : vector<8x1xf32> to vector<8x128xf32>
    %cst_33 = arith.constant 0.000000e+00 : f32
    %116 = vector.broadcast %cst_33 : f32 to vector<8x128xf32>
    %117 = arith.select %113, %115, %116 : vector<8x128xi1>, vector<8x128xf32>
    %cst_34 = arith.constant dense<0.000000e+00> : vector<128xf32>
    %118 = vector.multi_reduction <add>, %117, %cst_34 [0] : vector<8x128xf32> to vector<128xf32>
    %119 = vector.shape_cast %118 : vector<128xf32> to vector<1x128xf32>
    %c0_35 = arith.constant 0 : index
    %c0_36 = arith.constant 0 : index
    %120 = vector.load %arg4[%c0_35, %c0_36] : memref<1x128xf32, #tpu.memory_space<vmem>>, vector<1x128xf32>
    tpu.vector_store %arg4[%c0_35, %c0_36], %119 {strides = array<i32>} : memref<1x128xf32, #tpu.memory_space<vmem>>, vector<1x128xf32>,
    return
  }
}

</mosaic_0001>

<llo_original>
// kernel: tpu_custom_call.1
$region0: #{tpu_custom_call.1}
  #allocation0 [shape = 'u32[]', space=smem, size = 0x4, offset = 0x4, fixed_abs, tag = 'smem constant byte address 0x4 - core index']
  #allocation1 [shape = 'u32[144,128]{1,0:T(1,128)}', space=vmem, size = 0x12000, scoped, tag = 'internal scratch']
  %s0 = inlined_call_operand.hbm [shape: f32[8,32], index: 0, kind: input, shape index: {}]
  %s1 = inlined_call_operand.hbm [shape: bf16[32,256], index: 1, kind: input, shape index: {}]
  %s2 = inlined_call_operand.hbm [shape: bf16[2,256,256], index: 2, kind: input, shape index: {}]
  %s3 = inlined_call_operand.hbm [shape: f32[16,256], index: 3, kind: input, shape index: {}]
  %s4 = inlined_call_operand.hbm [shape: f32[1,128], index: 4, kind: output, shape index: {}]
  %s5 = sld [smem:[#allocation0]]
  $region42: #{tpu_custom_call.1} parent=0
    _
  %s7 = ssub.s32 1, %s5
  %s8 = scalar_select 0, %s7, %s5
  $region1: #{tpu_custom_call.1} parent=0
    #allocation2 [shape = 'u8[4096]{0}', space=vmem, size = 0x1000, scoped, tag = 'input window, operand 0, single buffered']
    #allocation3 [shape = 's32[1]{0}', space=sflag, size = 0x4, scoped, tag = 'scoped memory for tpu_custom_call.1']
    #allocation4 [shape = 's32[1]{0}', space=sflag, size = 0x4, scoped, tag = 'scoped memory for tpu_custom_call.1']
    #allocation5 [shape = 'u8[16384]{0}', space=vmem, size = 0x4000, scoped, tag = 'input window, operand 1, single buffered']
    #allocation6 [shape = 's32[1]{0}', space=sflag, size = 0x4, scoped, tag = 'scoped memory for tpu_custom_call.1']
    #allocation7 [shape = 'u8[262144]{0}', space=vmem, size = 0x40000, scoped, tag = 'input window, operand 2, single buffered']
    #allocation8 [shape = 'u8[16384]{0}', space=vmem, size = 0x4000, scoped, tag = 'input window, operand 3, single buffered']
    #allocation9 [shape = 's32[1]{0}', space=sflag, size = 0x4, scoped, tag = 'scoped memory for tpu_custom_call.1']
    #allocation10 [shape = 'u8[512]{0}', space=vmem, size = 0x400, scoped, tag = 'output window, operand 0, single buffered']
    %9 = vsyncpa [#allocation3], 0
    %10 = vsyncpa [#allocation6], 0
    %11 = vsyncpa [#allocation9], 0
    %12 = vsyncpa [#allocation4], 0
    // Predicated region
    $region2: #{tpu_custom_call.1} parent=1 // pred_check
      _
    $region3: #{tpu_custom_call.1} parent=1 // pred_check_branch
      %14 = sbr.rel (0) target = $region5
    $region4: #{tpu_custom_call.1} parent=1 // pred_region
      %s16 = ssub.s32 128, 128
      %17 = vsyncadd [#allocation3], %s16
      %s19 = sshll.u32 [#allocation2], 4
      %s20 = int_to_ptr.vmem [resolvable:$true] %s19
      %22 = dma.hbm_to_vmem [thread:$0]  %s0, 128, %s20, [#allocation3]
    $region5: #{tpu_custom_call.1} parent=1 // pred_fallthru
      _
    // Predicated region
    $region6: #{tpu_custom_call.1} parent=1 // pred_check
      _
    $region7: #{tpu_custom_call.1} parent=1 // pred_check_branch
      %24 = sbr.rel (0) target = $region9
    $region8: #{tpu_custom_call.1} parent=1 // pred_region
      %s26 = ssub.s32 512, 512
      %27 = vsyncadd [#allocation6], %s26
      %s28 = sshll.u32 [#allocation5], 4
      %s29 = int_to_ptr.vmem [resolvable:$true] %s28
      %34 = dma.hbm_to_vmem [thread:$0]  %s1, 512, %s29, [#allocation6], 128, 128, 8
    $region9: #{tpu_custom_call.1} parent=1 // pred_fallthru
      _
    // Predicated region
    $region10: #{tpu_custom_call.1} parent=1 // pred_check
      _
    $region11: #{tpu_custom_call.1} parent=1 // pred_check_branch
      %36 = sbr.rel (0) target = $region13
    $region12: #{tpu_custom_call.1} parent=1 // pred_region
      %s38 = ssub.s32 8192, 8192
      %39 = vsyncadd [#allocation6], %s38
      %s40 = sshll.u32 [#allocation7], 4
      %s41 = int_to_ptr.vmem [resolvable:$true] %s40
      %46 = dma.hbm_to_vmem [thread:$0]  %s2, 8192, %s41, [#allocation6], 128, 128, 8
    $region13: #{tpu_custom_call.1} parent=1 // pred_fallthru
      _
    // Predicated region
    $region14: #{tpu_custom_call.1} parent=1 // pred_check
      _
    $region15: #{tpu_custom_call.1} parent=1 // pred_check_branch
      %48 = sbr.rel (0) target = $region17
    $region16: #{tpu_custom_call.1} parent=1 // pred_region
      %s50 = ssub.s32 512, 512
      %51 = vsyncadd [#allocation9], %s50
      %s52 = sshll.u32 [#allocation8], 4
      %s53 = int_to_ptr.vmem [resolvable:$true] %s52
      %58 = dma.hbm_to_vmem [thread:$0]  %s3, 512, %s53, [#allocation9], 256, 256, 16
    $region17: #{tpu_custom_call.1} parent=1 // pred_fallthru
      _
    // Predicated region
    $region18: #{tpu_custom_call.1} parent=1 // pred_check
      _
    $region19: #{tpu_custom_call.1} parent=1 // pred_check_branch
      %60 = sbr.rel (0) target = $region21
    $region20: #{tpu_custom_call.1} parent=1 // pred_region
      %61 = dma.done [#allocation3], 128
    $region21: #{tpu_custom_call.1} parent=1 // pred_fallthru
      _
    // Predicated region
    $region22: #{tpu_custom_call.1} parent=1 // pred_check
      _
    $region23: #{tpu_custom_call.1} parent=1 // pred_check_branch
      %63 = sbr.rel (0) target = $region25
    $region24: #{tpu_custom_call.1} parent=1 // pred_region
      %64 = dma.done [#allocation6], 512
    $region25: #{tpu_custom_call.1} parent=1 // pred_fallthru
      _
    // Predicated region
    $region26: #{tpu_custom_call.1} parent=1 // pred_check
      _
    $region27: #{tpu_custom_call.1} parent=1 // pred_check_branch
      %66 = sbr.rel (0) target = $region29
    $region28: #{tpu_custom_call.1} parent=1 // pred_region
      %67 = dma.done [#allocation6], 8192
    $region29: #{tpu_custom_call.1} parent=1 // pred_fallthru
      _
    // Predicated region
    $region30: #{tpu_custom_call.1} parent=1 // pred_check
      _
    $region31: #{tpu_custom_call.1} parent=1 // pred_check_branch
      %69 = sbr.rel (0) target = $region33
    $region32: #{tpu_custom_call.1} parent=1 // pred_region
      %70 = dma.done [#allocation9], 512
    $region33: #{tpu_custom_call.1} parent=1 // pred_fallthru
      _
    %v72 = vld [vmem:[#allocation8] sm:$0xff]
    %v73 = vld [vmem:[#allocation8 + $0x8] sm:$0xff]
    %v74 = vld [vmem:[#allocation8 + $0x10] sm:$0xff]
    %v75 = vld [vmem:[#allocation8 + $0x18] sm:$0xff]
    %v76 = vld [vmem:[#allocation2] sm:$0xff]
    %v77 = vpack.c.bf16 %v76, %v76
    %v78 = vld [vmem:[#allocation5] sm:$0xff]
    %v79 = vld [vmem:[#allocation5 + $0x8] sm:$0xff]
    %v80 = vld [vmem:[#allocation5 + $0x10] sm:$0xff]
    %v81 = vld [vmem:[#allocation5 + $0x18] sm:$0xff]
    %v82 = vlaneseq
    %v83 = vshrl.u32 %v82, 7
    %v84 = vsub.s32 0, %v83
    %v85 = vrot.slane %v72, %v84
    %v86 = vlaneseq
    %v87 = vshrl.u32 %v86, 7
    %v88 = vsub.s32 0, %v87
    %v89 = vrot.slane %v73, %v88
    %v94 = vunpack.c.l.b16 %v78
    %v95 = vunpack.c.h.b16 %v78
    %v96 = vunpack.c.l.b16 %v79
    %v97 = vunpack.c.h.b16 %v79
    %v98 = vunpack.c.l.b16 %v80
    %v99 = vunpack.c.h.b16 %v80
    %v100 = vunpack.c.l.b16 %v81
    %v101 = vunpack.c.h.b16 %v81
    %v102 = vpack.c.b16 %v96, %v94
    %v103 = vpack.c.b16 %v97, %v95
    %v104 = vpack.c.b16 %v100, %v98
    %v105 = vpack.c.b16 %v101, %v99
    %vm110 = vcmask 261120
    %v112 = vsel %vm110, %v77, 0
    %114 = vmatprep.subr.bf16.mxu0 %v103
    %115 = vmatpush1.bf16.msra.mxu0 %v102
    %116 = vmatprep.subr.bf16.mxu0 %v105
    %117 = vmatpush1.bf16.msra.mxu0 %v104
    %118 = vmatprep.subr.bf16.mxu0 0
    %119 = vmatpush1.bf16.msra.mxu0 0
    %120 = vmatprep.subr.bf16.mxu0 0
    %121 = vmatpush1.bf16.msra.mxu0 0
    %122 = vmatprep.subr.bf16.mxu0 0
    %123 = vmatpush1.bf16.msra.mxu0 0
    %124 = vmatprep.subr.bf16.mxu0 0
    %125 = vmatpush1.bf16.msra.mxu0 0
    %126 = vmatprep.subr.bf16.mxu0 0
    %127 = vmatpush1.bf16.msra.mxu0 0
    %128 = vmatprep.subr.bf16.mxu0 0
    %129 = vmatpush1.bf16.msra.mxu0 0
    %130 = vmatprep.subr.bf16.mxu0 0
    %131 = vmatpush1.bf16.msra.mxu0 0
    %132 = vmatprep.subr.bf16.mxu0 0
    %133 = vmatpush1.bf16.msra.mxu0 0
    %134 = vmatprep.subr.bf16.mxu0 0
    %135 = vmatpush1.bf16.msra.mxu0 0
    %136 = vmatprep.subr.bf16.mxu0 0
    %137 = vmatpush1.bf16.msra.mxu0 0
    %138 = vmatprep.subr.bf16.mxu0 0
    %139 = vmatpush1.bf16.msra.mxu0 0
    %140 = vmatprep.subr.bf16.mxu0 0
    %141 = vmatpush1.bf16.msra.mxu0 0
    %142 = vmatprep.subr.bf16.mxu0 0
    %143 = vmatpush1.bf16.msra.mxu0 0
    %144 = vmatprep.subr.bf16.mxu0 0
    %145 = vmatpush1.bf16.msra.mxu0 0
    %146 = vmatprep.mubr.bf16.mxu0 0
    %147 = vmatmul.mubr.bf16.gmra.mrb[0].mxu0 %v112
    %v148 = vpop.f32.mrb[0].mxu0
    %v149 = vadd.f32 %v85, %v148
    %v150 = vpop.f32.mrb[0].mxu0
    %v151 = vadd.f32 %v89, %v150
    %v152 = vpop.f32.mrb[0].mxu0
    %v153 = vpop.f32.mrb[0].mxu0
    %154 = vdwg.mxu0
    %v155 = vmax.f32 %v149, 0.0
    %v156 = vmax.f32 %v151, 0.0
    %v157 = vrot.slane %v155, 4
    %v158 = vadd.f32 %v155, %v157
    %v159 = vrot.slane %v158, 2
    %v160 = vadd.f32 %v158, %v159
    %v161 = vrot.slane %v160, 1
    %v162 = vadd.f32 %v160, %v161
    %v163 = vrot.slane %v156, 4
    %v164 = vadd.f32 %v156, %v163
    %v165 = vrot.slane %v164, 2
    %v166 = vadd.f32 %v164, %v165
    %v167 = vrot.slane %v166, 1
    %v168 = vadd.f32 %v166, %v167
    %v169 = vmul.f32 %v155, %v155
    %v170 = vmul.f32 %v156, %v156
    %v171 = vrot.slane %v169, 4
    %v172 = vadd.f32 %v169, %v171
    %v173 = vrot.slane %v172, 2
    %v174 = vadd.f32 %v172, %v173
    %v175 = vrot.slane %v174, 1
    %v176 = vadd.f32 %v174, %v175
    %v177 = vrot.slane %v170, 4
    %v178 = vadd.f32 %v170, %v177
    %v179 = vrot.slane %v178, 2
    %v180 = vadd.f32 %v178, %v179
    %v181 = vrot.slane %v180, 1
    %v182 = vadd.f32 %v180, %v181
    %v183 = vmul.f32 %v162, 0.125
    %v184 = vmul.f32 %v168, 0.125
    %v185 = vmul.f32 %v176, 0.125
    %v186 = vmul.f32 %v182, 0.125
    %v187 = vmul.f32 %v183, %v183
    %v188 = vmul.f32 %v184, %v184
    %v189 = vsub.f32 %v185, %v187
    %v190 = vsub.f32 %v186, %v188
    %v191 = vadd.f32 %v189, 1e-05
    %v192 = vadd.f32 %v190, 1e-05
    %v193 = vrsqrt.pop %v191
    %v194 = vrsqrt.pop %v192
    %v195 = vmul.f32 %v72, %v193
    %v196 = vmul.f32 %v73, %v194
    %v197 = vmul.f32 %v183, %v195
    %v198 = vmul.f32 %v184, %v196
    %v201 = vrot.slane %v197, 7
    %v202 = vrot.slane %v198, 7
    %v205 = vsub.f32 %v72, %v201
    %v206 = vsub.f32 %v73, %v202
    %v207 = vlaneseq
    %v208 = vshrl.u32 %v207, 7
    %v209 = vsub.s32 1, %v208
    %v210 = vrot.slane %v195, %v209
    %v211 = vlaneseq
    %v212 = vshrl.u32 %v211, 7
    %v213 = vsub.s32 1, %v212
    %v214 = vrot.slane %v196, %v213
    %v215 = vmul.f32 %v155, %v210
    %v216 = vmul.f32 %v156, %v214
    %v217 = vlaneseq
    %v218 = vshrl.u32 %v217, 7
    %v219 = vsub.s32 2, %v218
    %v220 = vrot.slane %v205, %v219
    %v221 = vlaneseq
    %v222 = vshrl.u32 %v221, 7
    %v223 = vsub.s32 2, %v222
    %v224 = vrot.slane %v206, %v223
    %v225 = vadd.f32 %v215, %v220
    %v226 = vadd.f32 %v216, %v224
    %v227 = vpack.c.bf16 %v225, %v225
    %v228 = vpack.c.bf16 %v226, %v226
    %v229 = vld [vmem:[#allocation7] sm:$0xff]
    %v230 = vld [vmem:[#allocation7 + $0x8] sm:$0xff]
    %v231 = vld [vmem:[#allocation7 + $0x10] sm:$0xff]
    %v232 = vld [vmem:[#allocation7 + $0x18] sm:$0xff]
    %v233 = vld [vmem:[#allocation7 + $0x20] sm:$0xff]
    %v234 = vld [vmem:[#allocation7 + $0x28] sm:$0xff]
    %v235 = vld [vmem:[#allocation7 + $0x30] sm:$0xff]
    %v236 = vld [vmem:[#allocation7 + $0x38] sm:$0xff]
    %v237 = vld [vmem:[#allocation7 + $0x40] sm:$0xff]
    %v238 = vld [vmem:[#allocation7 + $0x48] sm:$0xff]
    %v239 = vld [vmem:[#allocation7 + $0x50] sm:$0xff]
    %v240 = vld [vmem:[#allocation7 + $0x58] sm:$0xff]
    %v241 = vld [vmem:[#allocation7 + $0x60] sm:$0xff]
    %v242 = vld [vmem:[#allocation7 + $0x68] sm:$0xff]
    %v243 = vld [vmem:[#allocation7 + $0x70] sm:$0xff]
    %v244 = vld [vmem:[#allocation7 + $0x78] sm:$0xff]
    %v245 = vld [vmem:[#allocation7 + $0x80] sm:$0xff]
    %v246 = vld [vmem:[#allocation7 + $0x88] sm:$0xff]
    %v247 = vld [vmem:[#allocation7 + $0x90] sm:$0xff]
    %v248 = vld [vmem:[#allocation7 + $0x98] sm:$0xff]
    %v249 = vld [vmem:[#allocation7 + $0xa0] sm:$0xff]
    %v250 = vld [vmem:[#allocation7 + $0xa8] sm:$0xff]
    %v251 = vld [vmem:[#allocation7 + $0xb0] sm:$0xff]
    %v252 = vld [vmem:[#allocation7 + $0xb8] sm:$0xff]
    %v253 = vld [vmem:[#allocation7 + $0xc0] sm:$0xff]
    %v254 = vld [vmem:[#allocation7 + $0xc8] sm:$0xff]
    %v255 = vld [vmem:[#allocation7 + $0xd0] sm:$0xff]
    %v256 = vld [vmem:[#allocation7 + $0xd8] sm:$0xff]
    %v257 = vld [vmem:[#allocation7 + $0xe0] sm:$0xff]
    %v258 = vld [vmem:[#allocation7 + $0xe8] sm:$0xff]
    %v259 = vld [vmem:[#allocation7 + $0xf0] sm:$0xff]
    %v260 = vld [vmem:[#allocation7 + $0xf8] sm:$0xff]
    %v261 = vlaneseq
    %v262 = vshrl.u32 %v261, 7
    %v263 = vsub.s32 3, %v262
    %v264 = vrot.slane %v72, %v263
    %v265 = vlaneseq
    %v266 = vshrl.u32 %v265, 7
    %v267 = vsub.s32 3, %v266
    %v268 = vrot.slane %v73, %v267
    %v301 = vunpack.c.l.b16 %v229
    %v302 = vunpack.c.h.b16 %v229
    %v303 = vunpack.c.l.b16 %v230
    %v304 = vunpack.c.h.b16 %v230
    %v305 = vunpack.c.l.b16 %v231
    %v306 = vunpack.c.h.b16 %v231
    %v307 = vunpack.c.l.b16 %v232
    %v308 = vunpack.c.h.b16 %v232
    %v309 = vunpack.c.l.b16 %v233
    %v310 = vunpack.c.h.b16 %v233
    %v311 = vunpack.c.l.b16 %v234
    %v312 = vunpack.c.h.b16 %v234
    %v313 = vunpack.c.l.b16 %v235
    %v314 = vunpack.c.h.b16 %v235
    %v315 = vunpack.c.l.b16 %v236
    %v316 = vunpack.c.h.b16 %v236
    %v317 = vunpack.c.l.b16 %v237
    %v318 = vunpack.c.h.b16 %v237
    %v319 = vunpack.c.l.b16 %v238
    %v320 = vunpack.c.h.b16 %v238
    %v321 = vunpack.c.l.b16 %v239
    %v322 = vunpack.c.h.b16 %v239
    %v323 = vunpack.c.l.b16 %v240
    %v324 = vunpack.c.h.b16 %v240
    %v325 = vunpack.c.l.b16 %v241
    %v326 = vunpack.c.h.b16 %v241
    %v327 = vunpack.c.l.b16 %v242
    %v328 = vunpack.c.h.b16 %v242
    %v329 = vunpack.c.l.b16 %v243
    %v330 = vunpack.c.h.b16 %v243
    %v331 = vunpack.c.l.b16 %v244
    %v332 = vunpack.c.h.b16 %v244
    %v333 = vunpack.c.l.b16 %v245
    %v334 = vunpack.c.h.b16 %v245
    %v335 = vunpack.c.l.b16 %v246
    %v336 = vunpack.c.h.b16 %v246
    %v337 = vunpack.c.l.b16 %v247
    %v338 = vunpack.c.h.b16 %v247
    %v339 = vunpack.c.l.b16 %v248
    %v340 = vunpack.c.h.b16 %v248
    %v341 = vunpack.c.l.b16 %v249
    %v342 = vunpack.c.h.b16 %v249
    %v343 = vunpack.c.l.b16 %v250
    %v344 = vunpack.c.h.b16 %v250
    %v345 = vunpack.c.l.b16 %v251
    %v346 = vunpack.c.h.b16 %v251
    %v347 = vunpack.c.l.b16 %v252
    %v348 = vunpack.c.h.b16 %v252
    %v349 = vunpack.c.l.b16 %v253
    %v350 = vunpack.c.h.b16 %v253
    %v351 = vunpack.c.l.b16 %v254
    %v352 = vunpack.c.h.b16 %v254
    %v353 = vunpack.c.l.b16 %v255
    %v354 = vunpack.c.h.b16 %v255
    %v355 = vunpack.c.l.b16 %v256
    %v356 = vunpack.c.h.b16 %v256
    %v357 = vunpack.c.l.b16 %v257
    %v358 = vunpack.c.h.b16 %v257
    %v359 = vunpack.c.l.b16 %v258
    %v360 = vunpack.c.h.b16 %v258
    %v361 = vunpack.c.l.b16 %v259
    %v362 = vunpack.c.h.b16 %v259
    %v363 = vunpack.c.l.b16 %v260
    %v364 = vunpack.c.h.b16 %v260
    %v365 = vpack.c.b16 %v303, %v301
    %v366 = vpack.c.b16 %v304, %v302
    %v367 = vpack.c.b16 %v307, %v305
    %v368 = vpack.c.b16 %v308, %v306
    %v369 = vpack.c.b16 %v311, %v309
    %v370 = vpack.c.b16 %v312, %v310
    %v371 = vpack.c.b16 %v315, %v313
    %v372 = vpack.c.b16 %v316, %v314
    %v373 = vpack.c.b16 %v319, %v317
    %v374 = vpack.c.b16 %v320, %v318
    %v375 = vpack.c.b16 %v323, %v321
    %v376 = vpack.c.b16 %v324, %v322
    %v377 = vpack.c.b16 %v327, %v325
    %v378 = vpack.c.b16 %v328, %v326
    %v379 = vpack.c.b16 %v331, %v329
    %v380 = vpack.c.b16 %v332, %v330
    %v381 = vpack.c.b16 %v335, %v333
    %v382 = vpack.c.b16 %v336, %v334
    %v383 = vpack.c.b16 %v339, %v337
    %v384 = vpack.c.b16 %v340, %v338
    %v385 = vpack.c.b16 %v343, %v341
    %v386 = vpack.c.b16 %v344, %v342
    %v387 = vpack.c.b16 %v347, %v345
    %v388 = vpack.c.b16 %v348, %v346
    %v389 = vpack.c.b16 %v351, %v349
    %v390 = vpack.c.b16 %v352, %v350
    %v391 = vpack.c.b16 %v355, %v353
    %v392 = vpack.c.b16 %v356, %v354
    %v393 = vpack.c.b16 %v359, %v357
    %v394 = vpack.c.b16 %v360, %v358
    %v395 = vpack.c.b16 %v363, %v361
    %v396 = vpack.c.b16 %v364, %v362
    %429 = vmatprep.subr.bf16.mxu0 %v366
    %430 = vmatpush1.bf16.msra.mxu0 %v365
    %431 = vmatprep.subr.bf16.mxu0 %v368
    %432 = vmatpush1.bf16.msra.mxu0 %v367
    %433 = vmatprep.subr.bf16.mxu0 %v370
    %434 = vmatpush1.bf16.msra.mxu0 %v369
    %435 = vmatprep.subr.bf16.mxu0 %v372
    %436 = vmatpush1.bf16.msra.mxu0 %v371
    %437 = vmatprep.subr.bf16.mxu0 %v374
    %438 = vmatpush1.bf16.msra.mxu0 %v373
    %439 = vmatprep.subr.bf16.mxu0 %v376
    %440 = vmatpush1.bf16.msra.mxu0 %v375
    %441 = vmatprep.subr.bf16.mxu0 %v378
    %442 = vmatpush1.bf16.msra.mxu0 %v377
    %443 = vmatprep.subr.bf16.mxu0 %v380
    %444 = vmatpush1.bf16.msra.mxu0 %v379
    %445 = vmatprep.subr.bf16.mxu0 %v382
    %446 = vmatpush1.bf16.msra.mxu0 %v381
    %447 = vmatprep.subr.bf16.mxu0 %v384
    %448 = vmatpush1.bf16.msra.mxu0 %v383
    %449 = vmatprep.subr.bf16.mxu0 %v386
    %450 = vmatpush1.bf16.msra.mxu0 %v385
    %451 = vmatprep.subr.bf16.mxu0 %v388
    %452 = vmatpush1.bf16.msra.mxu0 %v387
    %453 = vmatprep.subr.bf16.mxu0 %v390
    %454 = vmatpush1.bf16.msra.mxu0 %v389
    %455 = vmatprep.subr.bf16.mxu0 %v392
    %456 = vmatpush1.bf16.msra.mxu0 %v391
    %457 = vmatprep.subr.bf16.mxu0 %v394
    %458 = vmatpush1.bf16.msra.mxu0 %v393
    %459 = vmatprep.subr.bf16.mxu0 %v396
    %460 = vmatpush1.bf16.msra.mxu0 %v395
    %461 = vmatprep.mubr.bf16.mxu0 %v228
    %462 = vmatmul.mubr.bf16.gmra.mrb[0].mxu0 %v227
    %v463 = vpop.f32.mrb[0].mxu0
    %v464 = vadd.f32 %v264, %v463
    %v465 = vpop.f32.mrb[0].mxu0
    %v466 = vadd.f32 %v268, %v465
    %v467 = vpop.f32.mrb[0].mxu0
    %v468 = vpop.f32.mrb[0].mxu0
    %469 = vdwg.mxu0
    %v470 = vmax.f32 %v464, 0.0
    %v471 = vmax.f32 %v466, 0.0
    %v472 = vrot.slane %v470, 4
    %v473 = vadd.f32 %v470, %v472
    %v474 = vrot.slane %v473, 2
    %v475 = vadd.f32 %v473, %v474
    %v476 = vrot.slane %v475, 1
    %v477 = vadd.f32 %v475, %v476
    %v478 = vrot.slane %v471, 4
    %v479 = vadd.f32 %v471, %v478
    %v480 = vrot.slane %v479, 2
    %v481 = vadd.f32 %v479, %v480
    %v482 = vrot.slane %v481, 1
    %v483 = vadd.f32 %v481, %v482
    %v484 = vmul.f32 %v470, %v470
    %v485 = vmul.f32 %v471, %v471
    %v486 = vrot.slane %v484, 4
    %v487 = vadd.f32 %v484, %v486
    %v488 = vrot.slane %v487, 2
    %v489 = vadd.f32 %v487, %v488
    %v490 = vrot.slane %v489, 1
    %v491 = vadd.f32 %v489, %v490
    %v492 = vrot.slane %v485, 4
    %v493 = vadd.f32 %v485, %v492
    %v494 = vrot.slane %v493, 2
    %v495 = vadd.f32 %v493, %v494
    %v496 = vrot.slane %v495, 1
    %v497 = vadd.f32 %v495, %v496
    %v498 = vmul.f32 %v477, 0.125
    %v499 = vmul.f32 %v483, 0.125
    %v500 = vmul.f32 %v491, 0.125
    %v501 = vmul.f32 %v497, 0.125
    %v502 = vmul.f32 %v498, %v498
    %v503 = vmul.f32 %v499, %v499
    %v504 = vsub.f32 %v500, %v502
    %v505 = vsub.f32 %v501, %v503
    %v506 = vadd.f32 %v504, 1e-05
    %v507 = vadd.f32 %v505, 1e-05
    %v508 = vrsqrt.pop %v506
    %v509 = vrsqrt.pop %v507
    %v510 = vmul.f32 %v72, %v508
    %v511 = vmul.f32 %v73, %v509
    %v512 = vmul.f32 %v498, %v510
    %v513 = vmul.f32 %v499, %v511
    %v516 = vrot.slane %v512, 7
    %v517 = vrot.slane %v513, 7
    %v520 = vsub.f32 %v72, %v516
    %v521 = vsub.f32 %v73, %v517
    %v522 = vlaneseq
    %v523 = vshrl.u32 %v522, 7
    %v524 = vsub.s32 4, %v523
    %v525 = vrot.slane %v510, %v524
    %v526 = vlaneseq
    %v527 = vshrl.u32 %v526, 7
    %v528 = vsub.s32 4, %v527
    %v529 = vrot.slane %v511, %v528
    %v530 = vmul.f32 %v470, %v525
    %v531 = vmul.f32 %v471, %v529
    %v532 = vlaneseq
    %v533 = vshrl.u32 %v532, 7
    %v534 = vsub.s32 5, %v533
    %v535 = vrot.slane %v520, %v534
    %v536 = vlaneseq
    %v537 = vshrl.u32 %v536, 7
    %v538 = vsub.s32 5, %v537
    %v539 = vrot.slane %v521, %v538
    %v540 = vadd.f32 %v530, %v535
    %v541 = vadd.f32 %v531, %v539
    %v542 = vpack.c.bf16 %v540, %v540
    %v543 = vpack.c.bf16 %v541, %v541
    %s544 = scalar_lea.vmem [#allocation7], 256
    %v545 = vld [vmem:[%s544] sm:$0xff]
    %v546 = vld [vmem:[%s544 + $0x8] sm:$0xff]
    %v547 = vld [vmem:[%s544 + $0x10] sm:$0xff]
    %v548 = vld [vmem:[%s544 + $0x18] sm:$0xff]
    %v549 = vld [vmem:[%s544 + $0x20] sm:$0xff]
    %v550 = vld [vmem:[%s544 + $0x28] sm:$0xff]
    %v551 = vld [vmem:[%s544 + $0x30] sm:$0xff]
    %v552 = vld [vmem:[%s544 + $0x38] sm:$0xff]
    %v553 = vld [vmem:[%s544 + $0x40] sm:$0xff]
    %v554 = vld [vmem:[%s544 + $0x48] sm:$0xff]
    %v555 = vld [vmem:[%s544 + $0x50] sm:$0xff]
    %v556 = vld [vmem:[%s544 + $0x58] sm:$0xff]
    %v557 = vld [vmem:[%s544 + $0x60] sm:$0xff]
    %v558 = vld [vmem:[%s544 + $0x68] sm:$0xff]
    %v559 = vld [vmem:[%s544 + $0x70] sm:$0xff]
    %v560 = vld [vmem:[%s544 + $0x78] sm:$0xff]
    %v561 = vld [vmem:[%s544 + $0x80] sm:$0xff]
    %v562 = vld [vmem:[%s544 + $0x88] sm:$0xff]
    %v563 = vld [vmem:[%s544 + $0x90] sm:$0xff]
    %v564 = vld [vmem:[%s544 + $0x98] sm:$0xff]
    %v565 = vld [vmem:[%s544 + $0xa0] sm:$0xff]
    %v566 = vld [vmem:[%s544 + $0xa8] sm:$0xff]
    %v567 = vld [vmem:[%s544 + $0xb0] sm:$0xff]
    %v568 = vld [vmem:[%s544 + $0xb8] sm:$0xff]
    %v569 = vld [vmem:[%s544 + $0xc0] sm:$0xff]
    %v570 = vld [vmem:[%s544 + $0xc8] sm:$0xff]
    %v571 = vld [vmem:[%s544 + $0xd0] sm:$0xff]
    %v572 = vld [vmem:[%s544 + $0xd8] sm:$0xff]
    %v573 = vld [vmem:[%s544 + $0xe0] sm:$0xff]
    %v574 = vld [vmem:[%s544 + $0xe8] sm:$0xff]
    %v575 = vld [vmem:[%s544 + $0xf0] sm:$0xff]
    %v576 = vld [vmem:[%s544 + $0xf8] sm:$0xff]
    %v577 = vlaneseq
    %v578 = vshrl.u32 %v577, 7
    %v579 = vsub.s32 6, %v578
    %v580 = vrot.slane %v72, %v579
    %v581 = vlaneseq
    %v582 = vshrl.u32 %v581, 7
    %v583 = vsub.s32 6, %v582
    %v584 = vrot.slane %v73, %v583
    %v617 = vunpack.c.l.b16 %v545
    %v618 = vunpack.c.h.b16 %v545
    %v619 = vunpack.c.l.b16 %v546
    %v620 = vunpack.c.h.b16 %v546
    %v621 = vunpack.c.l.b16 %v547
    %v622 = vunpack.c.h.b16 %v547
    %v623 = vunpack.c.l.b16 %v548
    %v624 = vunpack.c.h.b16 %v548
    %v625 = vunpack.c.l.b16 %v549
    %v626 = vunpack.c.h.b16 %v549
    %v627 = vunpack.c.l.b16 %v550
    %v628 = vunpack.c.h.b16 %v550
    %v629 = vunpack.c.l.b16 %v551
    %v630 = vunpack.c.h.b16 %v551
    %v631 = vunpack.c.l.b16 %v552
    %v632 = vunpack.c.h.b16 %v552
    %v633 = vunpack.c.l.b16 %v553
    %v634 = vunpack.c.h.b16 %v553
    %v635 = vunpack.c.l.b16 %v554
    %v636 = vunpack.c.h.b16 %v554
    %v637 = vunpack.c.l.b16 %v555
    %v638 = vunpack.c.h.b16 %v555
    %v639 = vunpack.c.l.b16 %v556
    %v640 = vunpack.c.h.b16 %v556
    %v641 = vunpack.c.l.b16 %v557
    %v642 = vunpack.c.h.b16 %v557
    %v643 = vunpack.c.l.b16 %v558
    %v644 = vunpack.c.h.b16 %v558
    %v645 = vunpack.c.l.b16 %v559
    %v646 = vunpack.c.h.b16 %v559
    %v647 = vunpack.c.l.b16 %v560
    %v648 = vunpack.c.h.b16 %v560
    %v649 = vunpack.c.l.b16 %v561
    %v650 = vunpack.c.h.b16 %v561
    %v651 = vunpack.c.l.b16 %v562
    %v652 = vunpack.c.h.b16 %v562
    %v653 = vunpack.c.l.b16 %v563
    %v654 = vunpack.c.h.b16 %v563
    %v655 = vunpack.c.l.b16 %v564
    %v656 = vunpack.c.h.b16 %v564
    %v657 = vunpack.c.l.b16 %v565
    %v658 = vunpack.c.h.b16 %v565
    %v659 = vunpack.c.l.b16 %v566
    %v660 = vunpack.c.h.b16 %v566
    %v661 = vunpack.c.l.b16 %v567
    %v662 = vunpack.c.h.b16 %v567
    %v663 = vunpack.c.l.b16 %v568
    %v664 = vunpack.c.h.b16 %v568
    %v665 = vunpack.c.l.b16 %v569
    %v666 = vunpack.c.h.b16 %v569
    %v667 = vunpack.c.l.b16 %v570
    %v668 = vunpack.c.h.b16 %v570
    %v669 = vunpack.c.l.b16 %v571
    %v670 = vunpack.c.h.b16 %v571
    %v671 = vunpack.c.l.b16 %v572
    %v672 = vunpack.c.h.b16 %v572
    %v673 = vunpack.c.l.b16 %v573
    %v674 = vunpack.c.h.b16 %v573
    %v675 = vunpack.c.l.b16 %v574
    %v676 = vunpack.c.h.b16 %v574
    %v677 = vunpack.c.l.b16 %v575
    %v678 = vunpack.c.h.b16 %v575
    %v679 = vunpack.c.l.b16 %v576
    %v680 = vunpack.c.h.b16 %v576
    %v681 = vpack.c.b16 %v619, %v617
    %v682 = vpack.c.b16 %v620, %v618
    %v683 = vpack.c.b16 %v623, %v621
    %v684 = vpack.c.b16 %v624, %v622
    %v685 = vpack.c.b16 %v627, %v625
    %v686 = vpack.c.b16 %v628, %v626
    %v687 = vpack.c.b16 %v631, %v629
    %v688 = vpack.c.b16 %v632, %v630
    %v689 = vpack.c.b16 %v635, %v633
    %v690 = vpack.c.b16 %v636, %v634
    %v691 = vpack.c.b16 %v639, %v637
    %v692 = vpack.c.b16 %v640, %v638
    %v693 = vpack.c.b16 %v643, %v641
    %v694 = vpack.c.b16 %v644, %v642
    %v695 = vpack.c.b16 %v647, %v645
    %v696 = vpack.c.b16 %v648, %v646
    %v697 = vpack.c.b16 %v651, %v649
    %v698 = vpack.c.b16 %v652, %v650
    %v699 = vpack.c.b16 %v655, %v653
    %v700 = vpack.c.b16 %v656, %v654
    %v701 = vpack.c.b16 %v659, %v657
    %v702 = vpack.c.b16 %v660, %v658
    %v703 = vpack.c.b16 %v663, %v661
    %v704 = vpack.c.b16 %v664, %v662
    %v705 = vpack.c.b16 %v667, %v665
    %v706 = vpack.c.b16 %v668, %v666
    %v707 = vpack.c.b16 %v671, %v669
    %v708 = vpack.c.b16 %v672, %v670
    %v709 = vpack.c.b16 %v675, %v673
    %v710 = vpack.c.b16 %v676, %v674
    %v711 = vpack.c.b16 %v679, %v677
    %v712 = vpack.c.b16 %v680, %v678
    %745 = vmatprep.subr.bf16.mxu0 %v682
    %746 = vmatpush1.bf16.msra.mxu0 %v681
    %747 = vmatprep.subr.bf16.mxu0 %v684
    %748 = vmatpush1.bf16.msra.mxu0 %v683
    %749 = vmatprep.subr.bf16.mxu0 %v686
    %750 = vmatpush1.bf16.msra.mxu0 %v685
    %751 = vmatprep.subr.bf16.mxu0 %v688
    %752 = vmatpush1.bf16.msra.mxu0 %v687
    %753 = vmatprep.subr.bf16.mxu0 %v690
    %754 = vmatpush1.bf16.msra.mxu0 %v689
    %755 = vmatprep.subr.bf16.mxu0 %v692
    %756 = vmatpush1.bf16.msra.mxu0 %v691
    %757 = vmatprep.subr.bf16.mxu0 %v694
    %758 = vmatpush1.bf16.msra.mxu0 %v693
    %759 = vmatprep.subr.bf16.mxu0 %v696
    %760 = vmatpush1.bf16.msra.mxu0 %v695
    %761 = vmatprep.subr.bf16.mxu0 %v698
    %762 = vmatpush1.bf16.msra.mxu0 %v697
    %763 = vmatprep.subr.bf16.mxu0 %v700
    %764 = vmatpush1.bf16.msra.mxu0 %v699
    %765 = vmatprep.subr.bf16.mxu0 %v702
    %766 = vmatpush1.bf16.msra.mxu0 %v701
    %767 = vmatprep.subr.bf16.mxu0 %v704
    %768 = vmatpush1.bf16.msra.mxu0 %v703
    %769 = vmatprep.subr.bf16.mxu0 %v706
    %770 = vmatpush1.bf16.msra.mxu0 %v705
    %771 = vmatprep.subr.bf16.mxu0 %v708
    %772 = vmatpush1.bf16.msra.mxu0 %v707
    %773 = vmatprep.subr.bf16.mxu0 %v710
    %774 = vmatpush1.bf16.msra.mxu0 %v709
    %775 = vmatprep.subr.bf16.mxu0 %v712
    %776 = vmatpush1.bf16.msra.mxu0 %v711
    %777 = vmatprep.mubr.bf16.mxu0 %v543
    %778 = vmatmul.mubr.bf16.gmra.mrb[0].mxu0 %v542
    %v779 = vpop.f32.mrb[0].mxu0
    %v780 = vadd.f32 %v580, %v779
    %v781 = vpop.f32.mrb[0].mxu0
    %v782 = vadd.f32 %v584, %v781
    %v783 = vpop.f32.mrb[0].mxu0
    %v784 = vpop.f32.mrb[0].mxu0
    %785 = vdwg.mxu0
    %v786 = vmax.f32 %v780, 0.0
    %v787 = vmax.f32 %v782, 0.0
    %v788 = vrot.slane %v786, 4
    %v789 = vadd.f32 %v786, %v788
    %v790 = vrot.slane %v789, 2
    %v791 = vadd.f32 %v789, %v790
    %v792 = vrot.slane %v791, 1
    %v793 = vadd.f32 %v791, %v792
    %v794 = vrot.slane %v787, 4
    %v795 = vadd.f32 %v787, %v794
    %v796 = vrot.slane %v795, 2
    %v797 = vadd.f32 %v795, %v796
    %v798 = vrot.slane %v797, 1
    %v799 = vadd.f32 %v797, %v798
    %v800 = vmul.f32 %v786, %v786
    %v801 = vmul.f32 %v787, %v787
    %v802 = vrot.slane %v800, 4
    %v803 = vadd.f32 %v800, %v802
    %v804 = vrot.slane %v803, 2
    %v805 = vadd.f32 %v803, %v804
    %v806 = vrot.slane %v805, 1
    %v807 = vadd.f32 %v805, %v806
    %v808 = vrot.slane %v801, 4
    %v809 = vadd.f32 %v801, %v808
    %v810 = vrot.slane %v809, 2
    %v811 = vadd.f32 %v809, %v810
    %v812 = vrot.slane %v811, 1
    %v813 = vadd.f32 %v811, %v812
    %v814 = vmul.f32 %v793, 0.125
    %v815 = vmul.f32 %v799, 0.125
    %v816 = vmul.f32 %v807, 0.125
    %v817 = vmul.f32 %v813, 0.125
    %v818 = vmul.f32 %v814, %v814
    %v819 = vmul.f32 %v815, %v815
    %v820 = vsub.f32 %v816, %v818
    %v821 = vsub.f32 %v817, %v819
    %v822 = vadd.f32 %v820, 1e-05
    %v823 = vadd.f32 %v821, 1e-05
    %v824 = vrsqrt.pop %v822
    %v825 = vrsqrt.pop %v823
    %v826 = vmul.f32 %v72, %v824
    %v827 = vmul.f32 %v73, %v825
    %v828 = vmul.f32 %v814, %v826
    %v829 = vmul.f32 %v815, %v827
    %v832 = vrot.slane %v828, 7
    %v833 = vrot.slane %v829, 7
    %v836 = vsub.f32 %v74, %v832
    %v837 = vsub.f32 %v75, %v833
    %v840 = vrot.slane %v74, 2
    %v841 = vrot.slane %v75, 2
    %v844 = vmul.f32 %v826, %v840
    %v845 = vmul.f32 %v827, %v841
    %v846 = vrot.slane %v74, 1
    %v847 = vrot.slane %v75, 1
    %v850 = vmul.f32 %v836, %v846
    %v851 = vmul.f32 %v837, %v847
    %v852 = vadd.f32 %v850, %v840
    %v853 = vadd.f32 %v851, %v841
    %vm854 = vcmask 1040384
    %v855 = vsel %vm854, %v852, 0.0
    %v856 = vsel %vm854, %v853, 0.0
    %v857 = vadd.f32 %v855, %v856
    %858 = vadd.xlane.f32.xlu0 %v857
    %v859 = vpop.xlane.xlu0 %858
    %v860 = vlaneseq
    %v861 = vshrl.u32 %v860, 7
    %v862 = vsub.s32 7, %v861
    %v863 = vrot.slane %v844, %v862
    %v864 = vlaneseq
    %v865 = vshrl.u32 %v864, 7
    %v866 = vsub.s32 7, %v865
    %v867 = vrot.slane %v845, %v866
    %v868 = vmul.f32 %v786, %v863
    %v869 = vmul.f32 %v787, %v867
    %v870 = vadd.f32 %v868, %v869
    %871 = vadd.xlane.f32.xlu0 %v870
    %v872 = vpop.xlane.xlu0 %871
    %v873 = vlaneseq
    %v874 = vshrl.u32 %v873, 7
    %v875 = vsub.s32 0, %v874
    %v876 = vrot.slane %v859, %v875
    %v877 = vadd.f32 %v872, %v876
    %v878 = vxor.u32 %v877, 2147483648
    %v879 = vmul.f32 %v878, 1.442695
    %v880 = vpow.pop %v879
    %v881 = vadd.f32 %v880, 1.0
    %v882 = vrcp.pop %v881
    %v883 = vmul.f32 1.0, %v882
    %v884 = vlaneseq
    %v885 = vshrl.u32 %v884, 7
    %v886 = vlaneseq
    %v887 = vand.u32 %v886, 127
    %vm888 = vcmp.eq.s32.totalorder %v885, %v887
    %v889 = vsel %vm888, %v883, 0.0
    %v890 = vrot.slane %v889, 4
    %v891 = vadd.f32 %v889, %v890
    %v892 = vrot.slane %v891, 2
    %v893 = vadd.f32 %v891, %v892
    %v894 = vrot.slane %v893, 1
    %v895 = vadd.f32 %v893, %v894
    %896 = vst [vmem:[#allocation10] sm:$0x1] %v895
    // Predicated region
    $region34: #{tpu_custom_call.1} parent=1 // pred_check
      _
    $region35: #{tpu_custom_call.1} parent=1 // pred_check_branch
      %898 = sbr.rel (0) target = $region37
    $region36: #{tpu_custom_call.1} parent=1 // pred_region
      %s900 = ssub.s32 16, 16
      %901 = vsyncadd [#allocation4], %s900
      %s903 = sshll.u32 [#allocation10], 4
      %s904 = int_to_ptr.vmem [resolvable:$true] %s903
      %906 = dma.vmem_to_hbm [thread:$0]  %s904, 16, %s4, [#allocation4]
    $region37: #{tpu_custom_call.1} parent=1 // pred_fallthru
      _
    // Predicated region
    $region38: #{tpu_custom_call.1} parent=1 // pred_check
      _
    $region39: #{tpu_custom_call.1} parent=1 // pred_check_branch
      %908 = sbr.rel (0) target = $region41
    $region40: #{tpu_custom_call.1} parent=1 // pred_region
      %909 = dma.done [#allocation4], 16
    $region41: #{tpu_custom_call.1} parent=1 // pred_fallthru
      _
    %910 = vsyncpa [#allocation3], 1
    %911 = vsyncpa [#allocation6], 1
    %912 = vsyncpa [#allocation9], 1
    %913 = vsyncpa [#allocation4], 1

</llo_original>
